<compile_context>
chip_gen: v7x
topology: tpu7x:2x2x1
jax: 0.10.0
libtpu: 0.0.40
codegen_flags: <defaults>
</compile_context>

<pallas_src>
import functools

import jax
import jax.numpy as jnp
from jax.experimental import pallas as pl
from jax.experimental.pallas import tpu as pltpu


def _round_up(x, m):
    return ((x + m - 1) // m) * m


def _pick_batch_tile(batch):
    """Rows per grid step.

    - tiny batches: one step covering the 8-rounded batch.
    - batch > 128: at least 2 grid steps so ("parallel",) shards across v7x's
      two TensorCores; capped at 1024 rows (well under VMEM on every gen and
      amortizes ~0.35us/step pipeline overhead on v5e/v6e).
    """
    cap = 1024
    rb = _round_up(batch, 8)
    if rb <= 128:
        return rb
    half = _round_up((batch + 1) // 2, 8)
    return min(cap, half)


def _actor_critic_kernel(x_ref, w1_ref, b1_ref, w2_ref, b2_ref,
                         wh_ref, bh_ref, out_ref, *, action_dim):
    # Matmul input dtype follows the (possibly bf16) weights; accumulate in f32.
    cdt = w1_ref.dtype

    # Shared trunk: Linear -> Tanh -> Linear -> Tanh.
    h1 = jnp.tanh(
        jnp.dot(x_ref[...].astype(cdt), w1_ref[...],
                preferred_element_type=jnp.float32) + b1_ref[...])
    h2 = jnp.tanh(
        jnp.dot(h1.astype(cdt), w2_ref[...],
                preferred_element_type=jnp.float32) + b2_ref[...])

    # Fused actor + critic heads: one (TB, HID) x (HID, OUT) matmul.
    heads = (jnp.dot(h2.astype(cdt), wh_ref[...],
                     preferred_element_type=jnp.float32) + bh_ref[...])

    # Lane layout of `heads`: [0, A) actor logits, lane A critic value,
    # lanes > A are exact zeros (zero-padded weights / biases).
    col = jax.lax.broadcasted_iota(jnp.int32, heads.shape, 1)
    is_actor = col < action_dim

    # Max-subtracted softmax over the actor lanes only.
    logits = jnp.where(is_actor, heads, -jnp.inf)
    m = jnp.max(logits, axis=-1, keepdims=True)
    e = jnp.exp(logits - m)                       # padded lanes -> exp(-inf) = 0
    s = jnp.sum(e, axis=-1, keepdims=True)
    inv = pl.reciprocal(s, approx=True)           # EUP slot (free vs. VPU)
    inv = inv * (2.0 - s * inv)                   # one NR step -> ~f32-exact
    probs = e * inv

    # Lane-dense 128-wide store: probs in [0:A), value at lane A, zeros after.
    out_ref[...] = jnp.where(is_actor, probs, heads).astype(out_ref.dtype)


def prepare_params(w1, b1, w2, b2, wa, ba, wc, bc, *, use_bf16=True):
    """One-time (per-model) parameter preparation.

    Zero-pads to lane-dense shapes, fuses the actor and critic heads into one
    weight matrix, and optionally casts the matmul weights to bf16 (AFTER
    padding, so pad lanes/rows stay exactly zero). Biases stay f32 — they are
    added to the f32 accumulator inside the kernel.
    """
    state_dim, hidden = w1.shape
    action_dim = wa.shape[1]
    HID = _round_up(hidden, 128)                     # lane-dense hidden width
    OUT = max(128, _round_up(action_dim + 1, 128))   # lane-dense output slab

    f32 = jnp.float32
    w1p = jnp.zeros((state_dim, HID), f32).at[:, :hidden].set(w1)
    b1p = jnp.zeros((1, HID), f32).at[:, :hidden].set(b1)
    w2p = jnp.zeros((HID, HID), f32).at[:hidden, :hidden].set(w2)
    b2p = jnp.zeros((1, HID), f32).at[:, :hidden].set(b2)
    # Fused heads: [actor | critic | zeros] in one weight matrix.
    whp = (jnp.zeros((HID, OUT), f32)
           .at[:hidden, :action_dim].set(wa)
           .at[:hidden, action_dim].set(wc[:, 0]))
    bhp = (jnp.zeros((1, OUT), f32)
           .at[:, :action_dim].set(ba)
           .at[:, action_dim].set(bc[0, 0]))

    mm_dtype = jnp.bfloat16 if use_bf16 else f32
    w1p = w1p.astype(mm_dtype)
    w2p = w2p.astype(mm_dtype)
    whp = whp.astype(mm_dtype)

    params = (w1p, b1p, w2p, b2p, whp, bhp)
    return jax.tree_util.tree_map(jax.block_until_ready, params), action_dim


@functools.partial(jax.jit, static_argnames=("action_dim", "return_padded"))
def actor_critic_forward(state, padded_params, *, action_dim,
                         return_padded=False):
    w1p, b1p, w2p, b2p, whp, bhp = padded_params
    batch, state_dim = state.shape
    HID = w1p.shape[1]
    OUT = whp.shape[1]

    TB = _pick_batch_tile(batch)
    grid = (pl.cdiv(batch, TB),)   # no jnp.pad of state; partial last block OK

    kernel = functools.partial(_actor_critic_kernel, action_dim=action_dim)

    out = pl.pallas_call(
        kernel,
        out_shape=jax.ShapeDtypeStruct((batch, OUT), jnp.float32),
        grid_spec=pltpu.PrefetchScalarGridSpec(
            num_scalar_prefetch=0,
            grid=grid,
            in_specs=[
                pl.BlockSpec((TB, state_dim), lambda i: (i, 0)),   # streamed
                pl.BlockSpec((state_dim, HID), lambda i: (0, 0)),  # resident
                pl.BlockSpec((1, HID), lambda i: (0, 0)),
                pl.BlockSpec((HID, HID), lambda i: (0, 0)),
                pl.BlockSpec((1, HID), lambda i: (0, 0)),
                pl.BlockSpec((HID, OUT), lambda i: (0, 0)),
                pl.BlockSpec((1, OUT), lambda i: (0, 0)),
            ],
            out_specs=pl.BlockSpec((TB, OUT), lambda i: (i, 0)),
        ),
        compiler_params=pltpu.CompilerParams(
            dimension_semantics=("parallel",),
            vmem_limit_bytes=16 * 1024 * 1024,   # right-sized (footprint ~5 MiB)
        ),
    )(state, w1p, b1p, w2p, b2p, whp, bhp)

    if return_padded:
        # Lane-dense slab: probs in [0:A), value at lane A, zeros after.
        return out
    probs = out[:, :action_dim]
    value = out[:, action_dim:action_dim + 1]
    return probs, value


def _orthogonal(key, in_dim, out_dim):
    # Deterministic orthogonal init (gain=1.0), analogous to nn.init.orthogonal_.
    # Returned shape is (in_dim, out_dim) — already transposed for x @ W.
    a = jax.random.normal(key, (max(in_dim, out_dim), min(in_dim, out_dim)),
                          dtype=jnp.float32)
    q, r = jnp.linalg.qr(a)
    q = q * jnp.sign(jnp.diag(r))[None, :]
    w_out_in = q.T if in_dim >= out_dim else q
    if w_out_in.shape != (out_dim, in_dim):
        w_out_in = w_out_in.T
    return w_out_in.T                              # (in_dim, out_dim)


def make_params(state_dim, action_dim, hidden_dim=64):
    keys = jax.random.split(jax.random.PRNGKey(0), 4)
    w1 = _orthogonal(keys[0], state_dim, hidden_dim)
    b1 = jnp.zeros((1, hidden_dim), jnp.float32)
    w2 = _orthogonal(keys[1], hidden_dim, hidden_dim)
    b2 = jnp.zeros((1, hidden_dim), jnp.float32)
    wa = _orthogonal(keys[2], hidden_dim, action_dim)
    ba = jnp.zeros((1, action_dim), jnp.float32)
    wc = _orthogonal(keys[3], hidden_dim, 1)
    bc = jnp.zeros((1, 1), jnp.float32)
    return w1, b1, w2, b2, wa, ba, wc, bc


def reference_forward(state, w1, b1, w2, b2, wa, ba, wc, bc):
    h1 = jnp.tanh(state @ w1 + b1)
    h2 = jnp.tanh(h1 @ w2 + b2)
    probs = jax.nn.softmax(h2 @ wa + ba, axis=-1)
    value = h2 @ wc + bc
    return probs, value


if __name__ == "__main__":
    batch, state_dim, action_dim, hidden_dim = 8, 16, 6, 64

    params = make_params(state_dim, action_dim, hidden_dim)
    state = jax.random.normal(jax.random.PRNGKey(0), (batch, state_dim),
                              dtype=jnp.float32)
    ref_probs, ref_value = reference_forward(state, *params)

    # --- strict-parity path: f32 MXU inputs ---
    p_f32, act_dim = prepare_params(*params, use_bf16=False)
    probs, value = actor_critic_forward(state, p_f32, action_dim=act_dim)
    jax.block_until_ready((probs, value))
    assert probs.shape == (batch, action_dim)
    assert value.shape == (batch, 1)
    assert jnp.allclose(probs, ref_probs, atol=2e-5, rtol=1e-5)
    assert jnp.allclose(value, ref_value, atol=1e-5, rtol=1e-5)
    assert jnp.allclose(jnp.sum(probs, axis=-1), 1.0, atol=1e-4)

    # --- fast path: bf16 MXU inputs, f32 accumulate ---
    p_bf16, _ = prepare_params(*params, use_bf16=True)
    probs_bf, value_bf = actor_critic_forward(state, p_bf16, action_dim=act_dim)
    jax.block_until_ready((probs_bf, value_bf))
    assert jnp.allclose(probs_bf, ref_probs, atol=3e-2, rtol=3e-2)
    assert jnp.allclose(value_bf, ref_value, atol=3e-2, rtol=3e-2)
    assert jnp.allclose(jnp.sum(probs_bf, axis=-1), 1.0, atol=1e-3)

    # --- ragged, multi-step grid (exercises cdiv grid + masked partial block,
    #     and the >=2-step tiling that feeds both v7x TensorCores) ---
    big_batch = 300
    state_big = jax.random.normal(jax.random.PRNGKey(1),
                                  (big_batch, state_dim), dtype=jnp.float32)
    ref_pb, ref_vb = reference_forward(state_big, *params)
    probs_b, value_b = actor_critic_forward(state_big, p_bf16,
                                            action_dim=act_dim)
    jax.block_until_ready((probs_b, value_b))
    assert probs_b.shape == (big_batch, action_dim)
    assert value_b.shape == (big_batch, 1)
    assert jnp.allclose(probs_b, ref_pb, atol=3e-2, rtol=3e-2)
    assert jnp.allclose(value_b, ref_vb, atol=3e-2, rtol=3e-2)

    # TODO(synk): Categorical sampling / log_prob / entropy (get_action,
    # evaluate) are left to the host-side consumer of (probs, value).
    print("KERNEL_OK")
</pallas_src>

<mosaic_0001>
module attributes {stable_mosaic.version = 11 : i64} {
  func.func @_actor_critic_kernel(%arg0: i32, %arg1: memref<8x16xf32, #tpu.memory_space<vmem>>, %arg2: memref<16x128xf32, #tpu.memory_space<vmem>>, %arg3: memref<1x128xf32, #tpu.memory_space<vmem>>, %arg4: memref<128x128xf32, #tpu.memory_space<vmem>>, %arg5: memref<1x128xf32, #tpu.memory_space<vmem>>, %arg6: memref<128x128xf32, #tpu.memory_space<vmem>>, %arg7: memref<1x128xf32, #tpu.memory_space<vmem>>, %arg8: memref<8x128xf32, #tpu.memory_space<vmem>>) attributes {dimension_semantics = [#tpu.dimension_semantics<parallel>], iteration_bounds = array<i64: 1>, scalar_prefetch = 0 : i64, scratch_operands = 0 : i64, tpu.core_type = #tpu.core_type<tc>, window_params = [{transform_indices = @transform_0, window_bounds = array<i64: 8, 16>}, {pipeline_mode = #tpu.pipeline_mode<synchronous>, transform_indices = @transform_1, window_bounds = array<i64: 16, 128>}, {pipeline_mode = #tpu.pipeline_mode<synchronous>, transform_indices = @transform_2, window_bounds = array<i64: 1, 128>}, {pipeline_mode = #tpu.pipeline_mode<synchronous>, transform_indices = @transform_3, window_bounds = array<i64: 128, 128>}, {pipeline_mode = #tpu.pipeline_mode<synchronous>, transform_indices = @transform_4, window_bounds = array<i64: 1, 128>}, {pipeline_mode = #tpu.pipeline_mode<synchronous>, transform_indices = @transform_5, window_bounds = array<i64: 128, 128>}, {pipeline_mode = #tpu.pipeline_mode<synchronous>, transform_indices = @transform_6, window_bounds = array<i64: 1, 128>}, {transform_indices = @transform_7, window_bounds = array<i64: 8, 128>}]} {
    %c0 = arith.constant 0 : index
    %c0_0 = arith.constant 0 : index
    %0 = vector.load %arg1[%c0, %c0_0] : memref<8x16xf32, #tpu.memory_space<vmem>>, vector<8x16xf32>
    %c0_1 = arith.constant 0 : index
    %c0_2 = arith.constant 0 : index
    %1 = vector.load %arg2[%c0_1, %c0_2] : memref<16x128xf32, #tpu.memory_space<vmem>>, vector<16x128xf32>
    %cst = arith.constant dense<0.000000e+00> : vector<8x128xf32>
    %2 = tpu.matmul %0, %1, %cst {dimension_numbers = #tpu.dot_dimension_numbers<[1], [0], [0], [1], [0, 0, 1, 1], [], []>} : vector<8x16xf32>, vector<16x128xf32>, vector<8x128xf32> -> vector<8x128xf32>
    %c0_3 = arith.constant 0 : index
    %c0_4 = arith.constant 0 : index
    %3 = vector.load %arg3[%c0_3, %c0_4] : memref<1x128xf32, #tpu.memory_space<vmem>>, vector<1x128xf32>
    %4 = vector.broadcast %3 : vector<1x128xf32> to vector<8x128xf32>
    %5 = arith.addf %2, %4 : vector<8x128xf32>
    %6 = math.tanh %5 : vector<8x128xf32>
    %c0_5 = arith.constant 0 : index
    %c0_6 = arith.constant 0 : index
    %7 = vector.load %arg4[%c0_5, %c0_6] : memref<128x128xf32, #tpu.memory_space<vmem>>, vector<128x128xf32>
    %cst_7 = arith.constant dense<0.000000e+00> : vector<8x128xf32>
    %8 = tpu.matmul %6, %7, %cst_7 {dimension_numbers = #tpu.dot_dimension_numbers<[1], [0], [0], [1], [0, 0, 1, 1], [], []>} : vector<8x128xf32>, vector<128x128xf32>, vector<8x128xf32> -> vector<8x128xf32>
    %c0_8 = arith.constant 0 : index
    %c0_9 = arith.constant 0 : index
    %9 = vector.load %arg5[%c0_8, %c0_9] : memref<1x128xf32, #tpu.memory_space<vmem>>, vector<1x128xf32>
    %10 = vector.broadcast %9 : vector<1x128xf32> to vector<8x128xf32>
    %11 = arith.addf %8, %10 : vector<8x128xf32>
    %12 = math.tanh %11 : vector<8x128xf32>
    %c0_10 = arith.constant 0 : index
    %c0_11 = arith.constant 0 : index
    %13 = vector.load %arg6[%c0_10, %c0_11] : memref<128x128xf32, #tpu.memory_space<vmem>>, vector<128x128xf32>
    %cst_12 = arith.constant dense<0.000000e+00> : vector<8x128xf32>
    %14 = tpu.matmul %12, %13, %cst_12 {dimension_numbers = #tpu.dot_dimension_numbers<[1], [0], [0], [1], [0, 0, 1, 1], [], []>} : vector<8x128xf32>, vector<128x128xf32>, vector<8x128xf32> -> vector<8x128xf32>
    %c0_13 = arith.constant 0 : index
    %c0_14 = arith.constant 0 : index
    %15 = vector.load %arg7[%c0_13, %c0_14] : memref<1x128xf32, #tpu.memory_space<vmem>>, vector<1x128xf32>
    %16 = vector.broadcast %15 : vector<1x128xf32> to vector<8x128xf32>
    %17 = arith.addf %14, %16 : vector<8x128xf32>
    %18 = tpu.iota {dimensions = array<i32: 1>} : vector<8x128xi32>
    %c6_i32 = arith.constant 6 : i32
    %19 = vector.broadcast %c6_i32 : i32 to vector<8x128xi32>
    %20 = arith.cmpi slt, %18, %19 : vector<8x128xi32>
    %cst_15 = arith.constant 0xFF800000 : f32
    %21 = vector.broadcast %cst_15 : f32 to vector<8x128xf32>
    %22 = arith.select %20, %17, %21 : vector<8x128xi1>, vector<8x128xf32>
    %cst_16 = arith.constant dense<0xFF800000> : vector<8xf32>
    %23 = vector.multi_reduction <maximumf>, %22, %cst_16 [1] : vector<8x128xf32> to vector<8xf32>
    %24 = vector.shape_cast %23 : vector<8xf32> to vector<8x1xf32>
    %25 = vector.broadcast %24 : vector<8x1xf32> to vector<8x128xf32>
    %26 = arith.subf %22, %25 : vector<8x128xf32>
    %27 = math.exp %26 : vector<8x128xf32>
    %cst_17 = arith.constant dense<0.000000e+00> : vector<8xf32>
    %28 = vector.multi_reduction <add>, %27, %cst_17 [1] : vector<8x128xf32> to vector<8xf32>
    %29 = vector.shape_cast %28 : vector<8xf32> to vector<8x1xf32>
    %30 = tpu.reciprocal %29 {approx = true} : vector<8x1xf32> -> vector<8x1xf32>
    %31 = arith.mulf %29, %30 : vector<8x1xf32>
    %cst_18 = arith.constant 2.000000e+00 : f32
    %32 = vector.broadcast %cst_18 : f32 to vector<8x1xf32>
    %33 = arith.subf %32, %31 : vector<8x1xf32>
    %34 = arith.mulf %30, %33 : vector<8x1xf32>
    %35 = vector.broadcast %34 : vector<8x1xf32> to vector<8x128xf32>
    %36 = arith.mulf %27, %35 : vector<8x128xf32>
    %37 = arith.select %20, %36, %17 : vector<8x128xi1>, vector<8x128xf32>
    %c0_19 = arith.constant 0 : index
    %c0_20 = arith.constant 0 : index
    %38 = vector.load %arg8[%c0_19, %c0_20] : memref<8x128xf32, #tpu.memory_space<vmem>>, vector<8x128xf32>
    tpu.vector_store %arg8[%c0_19, %c0_20], %37 {strides = array<i32>} : memref<8x128xf32, #tpu.memory_space<vmem>>, vector<8x128xf32>,
    return
  }
  func.func @transform_0(%arg0: i32) -> (i32, i32) {
    %c0_i32 = arith.constant 0 : i32
    %c0_i32_0 = arith.constant 0 : i32
    return %arg0, %c0_i32 : i32, i32
  }
  func.func @transform_1(%arg0: i32) -> (i32, i32) {
    %c0_i32 = arith.constant 0 : i32
    %c0_i32_0 = arith.constant 0 : i32
    %c0_i32_1 = arith.constant 0 : i32
    return %c0_i32, %c0_i32_0 : i32, i32
  }
  func.func @transform_2(%arg0: i32) -> (i32, i32) {
    %c0_i32 = arith.constant 0 : i32
    %c0_i32_0 = arith.constant 0 : i32
    %c0_i32_1 = arith.constant 0 : i32
    return %c0_i32, %c0_i32_0 : i32, i32
  }
  func.func @transform_3(%arg0: i32) -> (i32, i32) {
    %c0_i32 = arith.constant 0 : i32
    %c0_i32_0 = arith.constant 0 : i32
    %c0_i32_1 = arith.constant 0 : i32
    return %c0_i32, %c0_i32_0 : i32, i32
  }
  func.func @transform_4(%arg0: i32) -> (i32, i32) {
    %c0_i32 = arith.constant 0 : i32
    %c0_i32_0 = arith.constant 0 : i32
    %c0_i32_1 = arith.constant 0 : i32
    return %c0_i32, %c0_i32_0 : i32, i32
  }
  func.func @transform_5(%arg0: i32) -> (i32, i32) {
    %c0_i32 = arith.constant 0 : i32
    %c0_i32_0 = arith.constant 0 : i32
    %c0_i32_1 = arith.constant 0 : i32
    return %c0_i32, %c0_i32_0 : i32, i32
  }
  func.func @transform_6(%arg0: i32) -> (i32, i32) {
    %c0_i32 = arith.constant 0 : i32
    %c0_i32_0 = arith.constant 0 : i32
    %c0_i32_1 = arith.constant 0 : i32
    return %c0_i32, %c0_i32_0 : i32, i32
  }
  func.func @transform_7(%arg0: i32) -> (i32, i32) {
    %c0_i32 = arith.constant 0 : i32
    %c0_i32_0 = arith.constant 0 : i32
    return %arg0, %c0_i32 : i32, i32
  }
}

</mosaic_0001>

<llo_original>
// kernel: actor_critic_forward.1
$region0: #{actor_critic_forward.1}
  #allocation0 [shape = 'u32[]', space=smem, size = 0x4, offset = 0x4, fixed_abs, tag = 'smem constant byte address 0x4 - core index']
  #allocation1 [shape = 'u32[144,128]{1,0:T(1,128)}', space=vmem, size = 0x12000, scoped, tag = 'internal scratch']
  %s0 = inlined_call_operand.hbm [shape: f32[8,16], index: 0, kind: input, shape index: {}]
  %s1 = inlined_call_operand.hbm [shape: f32[16,128], index: 1, kind: input, shape index: {}]
  %s2 = inlined_call_operand.vmem [shape: f32[1,128], index: 2, kind: input, shape index: {}]
  %s3 = inlined_call_operand.hbm [shape: f32[128,128], index: 3, kind: input, shape index: {}]
  %s4 = inlined_call_operand.vmem [shape: f32[1,128], index: 4, kind: input, shape index: {}]
  %s5 = inlined_call_operand.hbm [shape: f32[128,128], index: 5, kind: input, shape index: {}]
  %s6 = inlined_call_operand.vmem [shape: f32[1,128], index: 6, kind: input, shape index: {}]
  %s7 = inlined_call_operand.vmem [shape: f32[8,128], index: 7, kind: output, shape index: {}]
  %s8 = sld [smem:[#allocation0]]
  $region54: #{actor_critic_forward.1} parent=0
    _
  %s10 = ssub.s32 1, %s8
  %s11 = scalar_select 0, %s10, %s8
  $region1: #{actor_critic_forward.1} parent=0
    #allocation2 [shape = 'u8[4096]{0}', space=vmem, size = 0x1000, scoped, tag = 'input window, operand 0, single buffered']
    #allocation3 [shape = 's32[1]{0}', space=sflag, size = 0x4, scoped, tag = 'scoped memory for actor_critic_forward.1']
    #allocation4 [shape = 'u8[8192]{0}', space=vmem, size = 0x2000, scoped, tag = 'input window, operand 1, single buffered']
    #allocation5 [shape = 's32[1]{0}', space=sflag, size = 0x4, scoped, tag = 'scoped memory for actor_critic_forward.1']
    #allocation6 [shape = 'u8[65536]{0}', space=vmem, size = 0x10000, scoped, tag = 'input window, operand 3, single buffered']
    #allocation7 [shape = 'u8[65536]{0}', space=vmem, size = 0x10000, scoped, tag = 'input window, operand 5, single buffered']
    #allocation8 [shape = 's32[1]{0}', space=sflag, size = 0x4, scoped, tag = 'scoped memory for actor_critic_forward.1']
    %12 = vsyncpa [#allocation3], 0
    %13 = vsyncpa [#allocation5], 0
    %14 = vsyncpa [#allocation8], 0
    // Predicated region
    $region2: #{actor_critic_forward.1} parent=1 // pred_check
      _
    $region3: #{actor_critic_forward.1} parent=1 // pred_check_branch
      %16 = sbr.rel (0) target = $region5
    $region4: #{actor_critic_forward.1} parent=1 // pred_region
      %s18 = ssub.s32 128, 128
      %19 = vsyncadd [#allocation3], %s18
      %s21 = sshll.u32 [#allocation2], 4
      %s22 = int_to_ptr.vmem [resolvable:$true] %s21
      %24 = dma.hbm_to_vmem [thread:$0]  %s0, 128, %s22, [#allocation3]
    $region5: #{actor_critic_forward.1} parent=1 // pred_fallthru
      _
    // Predicated region
    $region6: #{actor_critic_forward.1} parent=1 // pred_check
      _
    $region7: #{actor_critic_forward.1} parent=1 // pred_check_branch
      %26 = sbr.rel (0) target = $region9
    $region8: #{actor_critic_forward.1} parent=1 // pred_region
      %s28 = ssub.s32 256, 256
      %29 = vsyncadd [#allocation5], %s28
      %s30 = sshll.u32 [#allocation4], 4
      %s31 = int_to_ptr.vmem [resolvable:$true] %s30
      %36 = dma.hbm_to_vmem [thread:$0]  %s1, 256, %s31, [#allocation5], 128, 128, 8
    $region9: #{actor_critic_forward.1} parent=1 // pred_fallthru
      _
    // Predicated region
    $region10: #{actor_critic_forward.1} parent=1 // pred_check
      _
    $region11: #{actor_critic_forward.1} parent=1 // pred_check_branch
      %38 = sbr.rel (0) target = $region13
    $region12: #{actor_critic_forward.1} parent=1 // pred_region
      _
    $region13: #{actor_critic_forward.1} parent=1 // pred_fallthru
      _
    // Predicated region
    $region14: #{actor_critic_forward.1} parent=1 // pred_check
      _
    $region15: #{actor_critic_forward.1} parent=1 // pred_check_branch
      %40 = sbr.rel (0) target = $region17
    $region16: #{actor_critic_forward.1} parent=1 // pred_region
      %s42 = ssub.s32 2048, 2048
      %43 = vsyncadd [#allocation5], %s42
      %s44 = sshll.u32 [#allocation6], 4
      %s45 = int_to_ptr.vmem [resolvable:$true] %s44
      %50 = dma.hbm_to_vmem [thread:$0]  %s3, 2048, %s45, [#allocation5], 128, 128, 8
    $region17: #{actor_critic_forward.1} parent=1 // pred_fallthru
      _
    // Predicated region
    $region18: #{actor_critic_forward.1} parent=1 // pred_check
      _
    $region19: #{actor_critic_forward.1} parent=1 // pred_check_branch
      %52 = sbr.rel (0) target = $region21
    $region20: #{actor_critic_forward.1} parent=1 // pred_region
      _
    $region21: #{actor_critic_forward.1} parent=1 // pred_fallthru
      _
    // Predicated region
    $region22: #{actor_critic_forward.1} parent=1 // pred_check
      _
    $region23: #{actor_critic_forward.1} parent=1 // pred_check_branch
      %54 = sbr.rel (0) target = $region25
    $region24: #{actor_critic_forward.1} parent=1 // pred_region
      %s56 = ssub.s32 2048, 2048
      %57 = vsyncadd [#allocation8], %s56
      %s58 = sshll.u32 [#allocation7], 4
      %s59 = int_to_ptr.vmem [resolvable:$true] %s58
      %64 = dma.hbm_to_vmem [thread:$0]  %s5, 2048, %s59, [#allocation8], 128, 128, 8
    $region25: #{actor_critic_forward.1} parent=1 // pred_fallthru
      _
    // Predicated region
    $region26: #{actor_critic_forward.1} parent=1 // pred_check
      _
    $region27: #{actor_critic_forward.1} parent=1 // pred_check_branch
      %66 = sbr.rel (0) target = $region29
    $region28: #{actor_critic_forward.1} parent=1 // pred_region
      _
    $region29: #{actor_critic_forward.1} parent=1 // pred_fallthru
      _
    // Predicated region
    $region30: #{actor_critic_forward.1} parent=1 // pred_check
      _
    $region31: #{actor_critic_forward.1} parent=1 // pred_check_branch
      %68 = sbr.rel (0) target = $region33
    $region32: #{actor_critic_forward.1} parent=1 // pred_region
      %69 = dma.done [#allocation3], 128
    $region33: #{actor_critic_forward.1} parent=1 // pred_fallthru
      _
    // Predicated region
    $region34: #{actor_critic_forward.1} parent=1 // pred_check
      _
    $region35: #{actor_critic_forward.1} parent=1 // pred_check_branch
      %71 = sbr.rel (0) target = $region37
    $region36: #{actor_critic_forward.1} parent=1 // pred_region
      %72 = dma.done [#allocation5], 256
    $region37: #{actor_critic_forward.1} parent=1 // pred_fallthru
      _
    // Predicated region
    $region38: #{actor_critic_forward.1} parent=1 // pred_check
      _
    $region39: #{actor_critic_forward.1} parent=1 // pred_check_branch
      %74 = sbr.rel (0) target = $region41
    $region40: #{actor_critic_forward.1} parent=1 // pred_region
      %75 = dma.done [#allocation5], 2048
    $region41: #{actor_critic_forward.1} parent=1 // pred_fallthru
      _
    // Predicated region
    $region42: #{actor_critic_forward.1} parent=1 // pred_check
      _
    $region43: #{actor_critic_forward.1} parent=1 // pred_check_branch
      %77 = sbr.rel (0) target = $region45
    $region44: #{actor_critic_forward.1} parent=1 // pred_region
      %78 = dma.done [#allocation8], 2048
    $region45: #{actor_critic_forward.1} parent=1 // pred_fallthru
      _
    %v79 = vld [vmem:[#allocation2] sm:$0xff]
    %v80 = vld [vmem:[#allocation4] sm:$0xff]
    %v81 = vld [vmem:[#allocation4 + $0x8] sm:$0xff]
    %v82 = vld [vmem:[%s2] sm:$0x1]
    %v84 = vlaneseq
    %v85 = vshrl.u32 %v84, 7
    %v86 = vsub.s32 0, %v85
    %v87 = vrot.slane %v82, %v86
    %vm89 = vcmask 130048
    %v91 = vsel %vm89, %v79, 0
    %93 = vmatprep.subr.mxu0 0.0
    %94 = vmatpush1.msra.mxu0 %v80
    %95 = vmatprep.subr.mxu0 0.0
    %96 = vmatpush1.msra.mxu0 %v81
    %97 = vmatprep.subr.mxu0 0.0
    %98 = vmatpush1.msra.mxu0 0.0
    %99 = vmatprep.subr.mxu0 0.0
    %100 = vmatpush1.msra.mxu0 0.0
    %101 = vmatprep.subr.mxu0 0.0
    %102 = vmatpush1.msra.mxu0 0.0
    %103 = vmatprep.subr.mxu0 0.0
    %104 = vmatpush1.msra.mxu0 0.0
    %105 = vmatprep.subr.mxu0 0.0
    %106 = vmatpush1.msra.mxu0 0.0
    %107 = vmatprep.subr.mxu0 0.0
    %108 = vmatpush1.msra.mxu0 0.0
    %109 = vmatprep.subr.mxu0 0.0
    %110 = vmatpush1.msra.mxu0 0.0
    %111 = vmatprep.subr.mxu0 0.0
    %112 = vmatpush1.msra.mxu0 0.0
    %113 = vmatprep.subr.mxu0 0.0
    %114 = vmatpush1.msra.mxu0 0.0
    %115 = vmatprep.subr.mxu0 0.0
    %116 = vmatpush1.msra.mxu0 0.0
    %117 = vmatprep.subr.mxu0 0.0
    %118 = vmatpush1.msra.mxu0 0.0
    %119 = vmatprep.subr.mxu0 0.0
    %120 = vmatpush1.msra.mxu0 0.0
    %121 = vmatprep.subr.mxu0 0.0
    %122 = vmatpush1.msra.mxu0 0.0
    %123 = vmatprep.subr.mxu0 0.0
    %124 = vmatpush1.msra.mxu0 0.0
    %125 = vmatprep.subr.mxu0 0.0
    %126 = vmatpush1.msra.mxu0 0.0
    %127 = vmatprep.subr.mxu0 0.0
    %128 = vmatpush1.msra.mxu0 0.0
    %129 = vmatprep.subr.mxu0 0.0
    %130 = vmatpush1.msra.mxu0 0.0
    %131 = vmatprep.subr.mxu0 0.0
    %132 = vmatpush1.msra.mxu0 0.0
    %133 = vmatprep.subr.mxu0 0.0
    %134 = vmatpush1.msra.mxu0 0.0
    %135 = vmatprep.subr.mxu0 0.0
    %136 = vmatpush1.msra.mxu0 0.0
    %137 = vmatprep.subr.mxu0 0.0
    %138 = vmatpush1.msra.mxu0 0.0
    %139 = vmatprep.subr.mxu0 0.0
    %140 = vmatpush1.msra.mxu0 0.0
    %141 = vmatprep.subr.mxu0 0.0
    %142 = vmatpush1.msra.mxu0 0.0
    %143 = vmatprep.subr.mxu0 0.0
    %144 = vmatpush1.msra.mxu0 0.0
    %145 = vmatprep.subr.mxu0 0.0
    %146 = vmatpush1.msra.mxu0 0.0
    %147 = vmatprep.subr.mxu0 0.0
    %148 = vmatpush1.msra.mxu0 0.0
    %149 = vmatprep.subr.mxu0 0.0
    %150 = vmatpush1.msra.mxu0 0.0
    %151 = vmatprep.subr.mxu0 0.0
    %152 = vmatpush1.msra.mxu0 0.0
    %153 = vmatprep.subr.mxu0 0.0
    %154 = vmatpush1.msra.mxu0 0.0
    %155 = vmatprep.subr.mxu0 0.0
    %156 = vmatpush1.msra.mxu0 0.0
    %157 = vmatprep.mubr.f32.mxu0 0.0
    %158 = vmatmul.mubr.f32.gmra.mrb[0].mxu0 %v91
    %v159 = vpop.f32.mrb[0].mxu0
    %v160 = vadd.f32 %v87, %v159
    %v161 = vpop.f32.mrb[0].mxu0
    %162 = vdwg.mxu0
    %v163 = vtanh.pop %v160
    %v164 = vld [vmem:[#allocation6] sm:$0xff]
    %v165 = vld [vmem:[#allocation6 + $0x8] sm:$0xff]
    %v166 = vld [vmem:[#allocation6 + $0x10] sm:$0xff]
    %v167 = vld [vmem:[#allocation6 + $0x18] sm:$0xff]
    %v168 = vld [vmem:[#allocation6 + $0x20] sm:$0xff]
    %v169 = vld [vmem:[#allocation6 + $0x28] sm:$0xff]
    %v170 = vld [vmem:[#allocation6 + $0x30] sm:$0xff]
    %v171 = vld [vmem:[#allocation6 + $0x38] sm:$0xff]
    %v172 = vld [vmem:[#allocation6 + $0x40] sm:$0xff]
    %v173 = vld [vmem:[#allocation6 + $0x48] sm:$0xff]
    %v174 = vld [vmem:[#allocation6 + $0x50] sm:$0xff]
    %v175 = vld [vmem:[#allocation6 + $0x58] sm:$0xff]
    %v176 = vld [vmem:[#allocation6 + $0x60] sm:$0xff]
    %v177 = vld [vmem:[#allocation6 + $0x68] sm:$0xff]
    %v178 = vld [vmem:[#allocation6 + $0x70] sm:$0xff]
    %v179 = vld [vmem:[#allocation6 + $0x78] sm:$0xff]
    %v180 = vld [vmem:[%s4] sm:$0x1]
    %v182 = vlaneseq
    %v183 = vshrl.u32 %v182, 7
    %v184 = vsub.s32 0, %v183
    %v185 = vrot.slane %v180, %v184
    %187 = vmatprep.subr.mxu0 0.0
    %188 = vmatpush1.msra.mxu0 %v164
    %189 = vmatprep.subr.mxu0 0.0
    %190 = vmatpush1.msra.mxu0 %v165
    %191 = vmatprep.subr.mxu0 0.0
    %192 = vmatpush1.msra.mxu0 %v166
    %193 = vmatprep.subr.mxu0 0.0
    %194 = vmatpush1.msra.mxu0 %v167
    %195 = vmatprep.subr.mxu0 0.0
    %196 = vmatpush1.msra.mxu0 %v168
    %197 = vmatprep.subr.mxu0 0.0
    %198 = vmatpush1.msra.mxu0 %v169
    %199 = vmatprep.subr.mxu0 0.0
    %200 = vmatpush1.msra.mxu0 %v170
    %201 = vmatprep.subr.mxu0 0.0
    %202 = vmatpush1.msra.mxu0 %v171
    %203 = vmatprep.subr.mxu0 0.0
    %204 = vmatpush1.msra.mxu0 %v172
    %205 = vmatprep.subr.mxu0 0.0
    %206 = vmatpush1.msra.mxu0 %v173
    %207 = vmatprep.subr.mxu0 0.0
    %208 = vmatpush1.msra.mxu0 %v174
    %209 = vmatprep.subr.mxu0 0.0
    %210 = vmatpush1.msra.mxu0 %v175
    %211 = vmatprep.subr.mxu0 0.0
    %212 = vmatpush1.msra.mxu0 %v176
    %213 = vmatprep.subr.mxu0 0.0
    %214 = vmatpush1.msra.mxu0 %v177
    %215 = vmatprep.subr.mxu0 0.0
    %216 = vmatpush1.msra.mxu0 %v178
    %217 = vmatprep.subr.mxu0 0.0
    %218 = vmatpush1.msra.mxu0 %v179
    %219 = vmatprep.subr.mxu0 0.0
    %220 = vmatpush1.msra.mxu0 0.0
    %221 = vmatprep.subr.mxu0 0.0
    %222 = vmatpush1.msra.mxu0 0.0
    %223 = vmatprep.subr.mxu0 0.0
    %224 = vmatpush1.msra.mxu0 0.0
    %225 = vmatprep.subr.mxu0 0.0
    %226 = vmatpush1.msra.mxu0 0.0
    %227 = vmatprep.subr.mxu0 0.0
    %228 = vmatpush1.msra.mxu0 0.0
    %229 = vmatprep.subr.mxu0 0.0
    %230 = vmatpush1.msra.mxu0 0.0
    %231 = vmatprep.subr.mxu0 0.0
    %232 = vmatpush1.msra.mxu0 0.0
    %233 = vmatprep.subr.mxu0 0.0
    %234 = vmatpush1.msra.mxu0 0.0
    %235 = vmatprep.subr.mxu0 0.0
    %236 = vmatpush1.msra.mxu0 0.0
    %237 = vmatprep.subr.mxu0 0.0
    %238 = vmatpush1.msra.mxu0 0.0
    %239 = vmatprep.subr.mxu0 0.0
    %240 = vmatpush1.msra.mxu0 0.0
    %241 = vmatprep.subr.mxu0 0.0
    %242 = vmatpush1.msra.mxu0 0.0
    %243 = vmatprep.subr.mxu0 0.0
    %244 = vmatpush1.msra.mxu0 0.0
    %245 = vmatprep.subr.mxu0 0.0
    %246 = vmatpush1.msra.mxu0 0.0
    %247 = vmatprep.subr.mxu0 0.0
    %248 = vmatpush1.msra.mxu0 0.0
    %249 = vmatprep.subr.mxu0 0.0
    %250 = vmatpush1.msra.mxu0 0.0
    %251 = vmatprep.mubr.f32.mxu0 0.0
    %252 = vmatmul.mubr.f32.gmra.mrb[0].mxu0 %v163
    %v253 = vpop.f32.mrb[0].mxu0
    %v254 = vadd.f32 %v185, %v253
    %v255 = vpop.f32.mrb[0].mxu0
    %256 = vdwg.mxu0
    %v257 = vtanh.pop %v254
    %v258 = vld [vmem:[#allocation7] sm:$0xff]
    %v259 = vld [vmem:[#allocation7 + $0x8] sm:$0xff]
    %v260 = vld [vmem:[#allocation7 + $0x10] sm:$0xff]
    %v261 = vld [vmem:[#allocation7 + $0x18] sm:$0xff]
    %v262 = vld [vmem:[#allocation7 + $0x20] sm:$0xff]
    %v263 = vld [vmem:[#allocation7 + $0x28] sm:$0xff]
    %v264 = vld [vmem:[#allocation7 + $0x30] sm:$0xff]
    %v265 = vld [vmem:[#allocation7 + $0x38] sm:$0xff]
    %v266 = vld [vmem:[#allocation7 + $0x40] sm:$0xff]
    %v267 = vld [vmem:[#allocation7 + $0x48] sm:$0xff]
    %v268 = vld [vmem:[#allocation7 + $0x50] sm:$0xff]
    %v269 = vld [vmem:[#allocation7 + $0x58] sm:$0xff]
    %v270 = vld [vmem:[#allocation7 + $0x60] sm:$0xff]
    %v271 = vld [vmem:[#allocation7 + $0x68] sm:$0xff]
    %v272 = vld [vmem:[#allocation7 + $0x70] sm:$0xff]
    %v273 = vld [vmem:[#allocation7 + $0x78] sm:$0xff]
    %v274 = vld [vmem:[%s6] sm:$0x1]
    %v276 = vlaneseq
    %v277 = vshrl.u32 %v276, 7
    %v278 = vsub.s32 0, %v277
    %v279 = vrot.slane %v274, %v278
    %281 = vmatprep.subr.mxu0 0.0
    %282 = vmatpush1.msra.mxu0 %v258
    %283 = vmatprep.subr.mxu0 0.0
    %284 = vmatpush1.msra.mxu0 %v259
    %285 = vmatprep.subr.mxu0 0.0
    %286 = vmatpush1.msra.mxu0 %v260
    %287 = vmatprep.subr.mxu0 0.0
    %288 = vmatpush1.msra.mxu0 %v261
    %289 = vmatprep.subr.mxu0 0.0
    %290 = vmatpush1.msra.mxu0 %v262
    %291 = vmatprep.subr.mxu0 0.0
    %292 = vmatpush1.msra.mxu0 %v263
    %293 = vmatprep.subr.mxu0 0.0
    %294 = vmatpush1.msra.mxu0 %v264
    %295 = vmatprep.subr.mxu0 0.0
    %296 = vmatpush1.msra.mxu0 %v265
    %297 = vmatprep.subr.mxu0 0.0
    %298 = vmatpush1.msra.mxu0 %v266
    %299 = vmatprep.subr.mxu0 0.0
    %300 = vmatpush1.msra.mxu0 %v267
    %301 = vmatprep.subr.mxu0 0.0
    %302 = vmatpush1.msra.mxu0 %v268
    %303 = vmatprep.subr.mxu0 0.0
    %304 = vmatpush1.msra.mxu0 %v269
    %305 = vmatprep.subr.mxu0 0.0
    %306 = vmatpush1.msra.mxu0 %v270
    %307 = vmatprep.subr.mxu0 0.0
    %308 = vmatpush1.msra.mxu0 %v271
    %309 = vmatprep.subr.mxu0 0.0
    %310 = vmatpush1.msra.mxu0 %v272
    %311 = vmatprep.subr.mxu0 0.0
    %312 = vmatpush1.msra.mxu0 %v273
    %313 = vmatprep.subr.mxu0 0.0
    %314 = vmatpush1.msra.mxu0 0.0
    %315 = vmatprep.subr.mxu0 0.0
    %316 = vmatpush1.msra.mxu0 0.0
    %317 = vmatprep.subr.mxu0 0.0
    %318 = vmatpush1.msra.mxu0 0.0
    %319 = vmatprep.subr.mxu0 0.0
    %320 = vmatpush1.msra.mxu0 0.0
    %321 = vmatprep.subr.mxu0 0.0
    %322 = vmatpush1.msra.mxu0 0.0
    %323 = vmatprep.subr.mxu0 0.0
    %324 = vmatpush1.msra.mxu0 0.0
    %325 = vmatprep.subr.mxu0 0.0
    %326 = vmatpush1.msra.mxu0 0.0
    %327 = vmatprep.subr.mxu0 0.0
    %328 = vmatpush1.msra.mxu0 0.0
    %329 = vmatprep.subr.mxu0 0.0
    %330 = vmatpush1.msra.mxu0 0.0
    %331 = vmatprep.subr.mxu0 0.0
    %332 = vmatpush1.msra.mxu0 0.0
    %333 = vmatprep.subr.mxu0 0.0
    %334 = vmatpush1.msra.mxu0 0.0
    %335 = vmatprep.subr.mxu0 0.0
    %336 = vmatpush1.msra.mxu0 0.0
    %337 = vmatprep.subr.mxu0 0.0
    %338 = vmatpush1.msra.mxu0 0.0
    %339 = vmatprep.subr.mxu0 0.0
    %340 = vmatpush1.msra.mxu0 0.0
    %341 = vmatprep.subr.mxu0 0.0
    %342 = vmatpush1.msra.mxu0 0.0
    %343 = vmatprep.subr.mxu0 0.0
    %344 = vmatpush1.msra.mxu0 0.0
    %345 = vmatprep.mubr.f32.mxu0 0.0
    %346 = vmatmul.mubr.f32.gmra.mrb[0].mxu0 %v257
    %v347 = vpop.f32.mrb[0].mxu0
    %v348 = vadd.f32 %v279, %v347
    %v349 = vpop.f32.mrb[0].mxu0
    %350 = vdwg.mxu0
    %v351 = vlaneseq
    %v352 = vand.u32 %v351, 127
    %vm353 = vcmp.lt.s32.totalorder %v352, 6
    %v354 = vsel %vm353, %v348, -inf
    %355 = vmax.xlane.f32.xlu0 %v354
    %v356 = vpop.xlane.xlu0 %355
    %v357 = vsub.f32 %v354, %v356
    %v358 = vmul.f32 %v357, 1.442695
    %v359 = vpow.pop %v358
    %360 = vadd.xlane.f32.xlu0 %v359
    %v361 = vpop.xlane.xlu0 %360
    %v362 = vrcp.pop %v361
    %v363 = vmul.f32 %v361, %v362
    %v364 = vsub.f32 2.0, %v363
    %v365 = vmul.f32 %v362, %v364
    %v366 = vmul.f32 %v359, %v365
    %v367 = vsel %vm353, %v366, %v348
    %368 = vst [vmem:[%s7] sm:$0xff] %v367
    // Predicated region
    $region46: #{actor_critic_forward.1} parent=1 // pred_check
      _
    $region47: #{actor_critic_forward.1} parent=1 // pred_check_branch
      %370 = sbr.rel (0) target = $region49
    $region48: #{actor_critic_forward.1} parent=1 // pred_region
      _
    $region49: #{actor_critic_forward.1} parent=1 // pred_fallthru
      _
    // Predicated region
    $region50: #{actor_critic_forward.1} parent=1 // pred_check
      _
    $region51: #{actor_critic_forward.1} parent=1 // pred_check_branch
      %372 = sbr.rel (0) target = $region53
    $region52: #{actor_critic_forward.1} parent=1 // pred_region
      _
    $region53: #{actor_critic_forward.1} parent=1 // pred_fallthru
      _
    %373 = vsyncpa [#allocation3], 1
    %374 = vsyncpa [#allocation5], 1
    %375 = vsyncpa [#allocation8], 1

</llo_original>
